<compile_context>
chip_gen: v7x
topology: tpu7x:2x2x1
jax: 0.10.0
libtpu: 0.0.40
codegen_flags: <defaults>
</compile_context>

<pallas_src>
import functools

import jax
import jax.numpy as jnp
from jax.experimental import pallas as pl
from jax.experimental.pallas import tpu as pltpu

EPS = 1e-5  # torch.nn.BatchNorm2d default eps


def bn_kernel(x_ref, gamma_ref, beta_ref, o_ref,
              sum_ref, sq_ref, a_ref, bsh_ref, *, inv_count):
    # x_ref block: (N, RB, tL) — full batch, RB independent rows (= (g, c)
    # pairs), tL lanes of the flattened H*W axis.
    p = pl.program_id(1)   # phase: 0 = accumulate stats, 1 = normalize
    l = pl.program_id(2)   # lane-tile index along H*W

    @pl.when(jnp.logical_and(p == 0, l == 0))
    def _():
        sum_ref[...] = jnp.zeros_like(sum_ref)
        sq_ref[...] = jnp.zeros_like(sq_ref)

    @pl.when(p == 0)
    def _():
        # Single sweep: accumulate sum and sum-of-squares in f32.
        x = x_ref[...].astype(jnp.float32)                       # (N, RB, tL)
        xs = jnp.sum(x, axis=0)                                  # (RB, tL)
        x2 = jnp.sum(x * x, axis=0)                              # (RB, tL)
        sum_ref[...] += jnp.sum(xs, axis=-1, keepdims=True)      # (RB, 1)
        sq_ref[...] += jnp.sum(x2, axis=-1, keepdims=True)       # (RB, 1)

    @pl.when(jnp.logical_and(p == 1, l == 0))
    def _():
        # Fold stats + affine into y = x * a + b.
        mean = sum_ref[...] * inv_count                          # (RB, 1)
        var = sq_ref[...] * inv_count - mean * mean              # biased var
        inv_std = jax.lax.rsqrt(var + EPS)                       # EUP rsqrt
        a = gamma_ref[...] * inv_std
        a_ref[...] = a
        bsh_ref[...] = beta_ref[...] - mean * a

    @pl.when(p == 1)
    def _():
        x = x_ref[...].astype(jnp.float32)                       # (N, RB, tL)
        y = x * a_ref[...][None, :, :] + bsh_ref[...][None, :, :]
        o_ref[...] = y.astype(o_ref.dtype)


def _pick_row_block(R):
    """Multiple-of-8 divisor of R; prefer bigger blocks but keep >=2 row blocks
    so the 'parallel' row axis can still shard across cores."""
    if R % 8 != 0:
        return R
    for cand in (32, 24, 16):
        if R % cand == 0 and R // cand >= 2:
            return cand
    return 8


def _pick_lane_tile(hw, n, rb, itemsize,
                    budget_bytes=2 * 1024 * 1024, max_lanes=4096):
    """Largest multiple of 128 that divides hw, fits the per-block VMEM budget
    and the lane cap; falls back to the full extent for unaligned hw."""
    if hw % 128 != 0:
        return hw
    cap = budget_bytes // max(1, n * rb * itemsize)
    cap = min(cap, max_lanes, hw)
    cap = max(cap - cap % 128, 128)
    for t in range(cap, 127, -128):
        if hw % t == 0:
            return t
    return 128


def bn_forward(x, gamma, beta):
    N, G, C, H, W = x.shape
    HW = H * W
    R = G * C

    # Free, contiguous reshape — no HBM round trip (row r = g*C + c).
    xr = x.reshape(N, R, HW)
    # Per-row affine params (gamma/beta shared across groups) — tiny host op.
    gk = jnp.tile(gamma.astype(jnp.float32), G).reshape(R, 1)
    bk = jnp.tile(beta.astype(jnp.float32), G).reshape(R, 1)

    itemsize = x.dtype.itemsize
    RB = _pick_row_block(R)                 # sublane-aligned row block
    tL = _pick_lane_tile(HW, N, RB, itemsize)
    nR = R // RB
    nL = HW // tL                           # exact: tL divides HW by design
    inv_count = 1.0 / float(N * HW)         # per-(group, channel) element count

    kernel = functools.partial(bn_kernel, inv_count=inv_count)

    out = pl.pallas_call(
        kernel,
        out_shape=jax.ShapeDtypeStruct((N, R, HW), x.dtype),
        grid_spec=pltpu.PrefetchScalarGridSpec(
            num_scalar_prefetch=0,
            grid=(nR, 2, nL),               # rows (parallel), phase, lane tiles
            in_specs=[
                pl.BlockSpec((N, RB, tL), lambda r, p, l: (0, r, l)),
                pl.BlockSpec((RB, 1), lambda r, p, l: (r, 0)),
                pl.BlockSpec((RB, 1), lambda r, p, l: (r, 0)),
            ],
            # l*p keeps the output block pinned during the stats phase, so no
            # uninitialized blocks are ever written back; phase 1 streams the
            # normalized tiles out exactly once.
            out_specs=pl.BlockSpec((N, RB, tL), lambda r, p, l: (0, r, l * p)),
            scratch_shapes=[
                pltpu.VMEM((RB, 1), jnp.float32),   # sum
                pltpu.VMEM((RB, 1), jnp.float32),   # sum of squares
                pltpu.VMEM((RB, 1), jnp.float32),   # a = gamma * inv_std
                pltpu.VMEM((RB, 1), jnp.float32),   # b = beta - mean * a
            ],
        ),
        compiler_params=pltpu.CompilerParams(
            dimension_semantics=("parallel", "arbitrary", "arbitrary")),
    )(xr, gk, bk)

    return out.reshape(N, G, C, H, W)       # free reshape back


if __name__ == "__main__":
    key = jax.random.PRNGKey(0)
    kx, kg, kb = jax.random.split(key, 3)

    # Small shapes implied by the forward: x[:, i] must be NCHW for BatchNorm2d(C).
    N, G, C, H, W = 2, 4, 4, 8, 8
    x = jax.random.normal(kx, (N, G, C, H, W), dtype=jnp.float32)

    # Deterministic parameter init (shapes from BatchNorm2d(in_channels=C)).
    gamma = 1.0 + 0.1 * jax.random.normal(kg, (C,), dtype=jnp.float32)  # weight
    beta = 0.1 * jax.random.normal(kb, (C,), dtype=jnp.float32)         # bias

    out = jax.block_until_ready(bn_forward(x, gamma, beta))

    # Pure-JAX reference: per-group, per-channel batch stats over (N, H, W).
    mean = x.mean(axis=(0, 3, 4), keepdims=True)
    var = ((x - mean) ** 2).mean(axis=(0, 3, 4), keepdims=True)
    ref = ((x - mean) * jax.lax.rsqrt(var + EPS)
           * gamma[None, None, :, None, None]
           + beta[None, None, :, None, None])

    assert out.shape == x.shape and out.dtype == x.dtype
    assert jnp.allclose(out, ref, atol=1e-4, rtol=1e-4)
    print("KERNEL_OK")
</pallas_src>

<mosaic_0001>
module attributes {stable_mosaic.version = 11 : i64} {
  func.func @bn_kernel(%arg0: i32, %arg1: i32, %arg2: i32, %arg3: memref<2x8x64xf32, #tpu.memory_space<vmem>>, %arg4: memref<8x1xf32, #tpu.memory_space<vmem>>, %arg5: memref<8x1xf32, #tpu.memory_space<vmem>>, %arg6: memref<2x8x64xf32, #tpu.memory_space<vmem>>, %arg7: memref<8x1xf32, #tpu.memory_space<vmem>>, %arg8: memref<8x1xf32, #tpu.memory_space<vmem>>, %arg9: memref<8x1xf32, #tpu.memory_space<vmem>>, %arg10: memref<8x1xf32, #tpu.memory_space<vmem>>) attributes {dimension_semantics = [#tpu.dimension_semantics<parallel>, #tpu.dimension_semantics<arbitrary>, #tpu.dimension_semantics<arbitrary>], iteration_bounds = array<i64: 2, 2, 1>, scalar_prefetch = 0 : i64, scratch_operands = 4 : i64, tpu.core_type = #tpu.core_type<tc>, window_params = [{transform_indices = @transform_0, window_bounds = array<i64: 2, 8, 64>}, {transform_indices = @transform_1, window_bounds = array<i64: 8, 1>}, {transform_indices = @transform_2, window_bounds = array<i64: 8, 1>}, {transform_indices = @transform_3, window_bounds = array<i64: 2, 8, 64>}]} {
    %c0_i32 = arith.constant 0 : i32
    %0 = arith.cmpi eq, %arg1, %c0_i32 : i32
    %c0_i32_0 = arith.constant 0 : i32
    %1 = arith.cmpi eq, %arg2, %c0_i32_0 : i32
    %2 = arith.andi %0, %1 : i1
    %3 = arith.extui %2 : i1 to i32
    %c0_i32_1 = arith.constant 0 : i32
    %4 = arith.cmpi ne, %3, %c0_i32_1 : i32
    scf.if %4 {
      %cst = arith.constant 0.000000e+00 : f32
      %16 = vector.broadcast %cst : f32 to vector<8x1xf32>
      %c0 = arith.constant 0 : index
      %c0_8 = arith.constant 0 : index
      %17 = vector.load %arg7[%c0, %c0_8] : memref<8x1xf32, #tpu.memory_space<vmem>>, vector<8x1xf32>
      tpu.vector_store %arg7[%c0, %c0_8], %16 {strides = array<i32>} : memref<8x1xf32, #tpu.memory_space<vmem>>, vector<8x1xf32>,
      %cst_9 = arith.constant 0.000000e+00 : f32
      %18 = vector.broadcast %cst_9 : f32 to vector<8x1xf32>
      %c0_10 = arith.constant 0 : index
      %c0_11 = arith.constant 0 : index
      %19 = vector.load %arg8[%c0_10, %c0_11] : memref<8x1xf32, #tpu.memory_space<vmem>>, vector<8x1xf32>
      tpu.vector_store %arg8[%c0_10, %c0_11], %18 {strides = array<i32>} : memref<8x1xf32, #tpu.memory_space<vmem>>, vector<8x1xf32>,
    } else {
    }
    %c0_i32_2 = arith.constant 0 : i32
    %5 = arith.cmpi eq, %arg1, %c0_i32_2 : i32
    %6 = arith.extui %5 : i1 to i32
    %c0_i32_3 = arith.constant 0 : i32
    %7 = arith.cmpi ne, %6, %c0_i32_3 : i32
    scf.if %7 {
      %c0 = arith.constant 0 : index
      %c0_8 = arith.constant 0 : index
      %c0_9 = arith.constant 0 : index
      %16 = vector.load %arg3[%c0, %c0_8, %c0_9] : memref<2x8x64xf32, #tpu.memory_space<vmem>>, vector<2x8x64xf32>
      %cst = arith.constant dense<0.000000e+00> : vector<8x64xf32>
      %17 = vector.multi_reduction <add>, %16, %cst [0] : vector<2x8x64xf32> to vector<8x64xf32>
      %18 = arith.mulf %16, %16 : vector<2x8x64xf32>
      %cst_10 = arith.constant dense<0.000000e+00> : vector<8x64xf32>
      %19 = vector.multi_reduction <add>, %18, %cst_10 [0] : vector<2x8x64xf32> to vector<8x64xf32>
      %c0_11 = arith.constant 0 : index
      %c0_12 = arith.constant 0 : index
      %20 = vector.load %arg7[%c0_11, %c0_12] : memref<8x1xf32, #tpu.memory_space<vmem>>, vector<8x1xf32>
      %cst_13 = arith.constant dense<0.000000e+00> : vector<8xf32>
      %21 = vector.multi_reduction <add>, %17, %cst_13 [1] : vector<8x64xf32> to vector<8xf32>
      %22 = vector.shape_cast %21 : vector<8xf32> to vector<8x1xf32>
      %23 = arith.addf %20, %22 : vector<8x1xf32>
      %c0_14 = arith.constant 0 : index
      %c0_15 = arith.constant 0 : index
      %24 = vector.load %arg7[%c0_14, %c0_15] : memref<8x1xf32, #tpu.memory_space<vmem>>, vector<8x1xf32>
      tpu.vector_store %arg7[%c0_14, %c0_15], %23 {strides = array<i32>} : memref<8x1xf32, #tpu.memory_space<vmem>>, vector<8x1xf32>,
      %c0_16 = arith.constant 0 : index
      %c0_17 = arith.constant 0 : index
      %25 = vector.load %arg8[%c0_16, %c0_17] : memref<8x1xf32, #tpu.memory_space<vmem>>, vector<8x1xf32>
      %cst_18 = arith.constant dense<0.000000e+00> : vector<8xf32>
      %26 = vector.multi_reduction <add>, %19, %cst_18 [1] : vector<8x64xf32> to vector<8xf32>
      %27 = vector.shape_cast %26 : vector<8xf32> to vector<8x1xf32>
      %28 = arith.addf %25, %27 : vector<8x1xf32>
      %c0_19 = arith.constant 0 : index
      %c0_20 = arith.constant 0 : index
      %29 = vector.load %arg8[%c0_19, %c0_20] : memref<8x1xf32, #tpu.memory_space<vmem>>, vector<8x1xf32>
      tpu.vector_store %arg8[%c0_19, %c0_20], %28 {strides = array<i32>} : memref<8x1xf32, #tpu.memory_space<vmem>>, vector<8x1xf32>,
    } else {
    }
    %c1_i32 = arith.constant 1 : i32
    %8 = arith.cmpi eq, %arg1, %c1_i32 : i32
    %c0_i32_4 = arith.constant 0 : i32
    %9 = arith.cmpi eq, %arg2, %c0_i32_4 : i32
    %10 = arith.andi %8, %9 : i1
    %11 = arith.extui %10 : i1 to i32
    %c0_i32_5 = arith.constant 0 : i32
    %12 = arith.cmpi ne, %11, %c0_i32_5 : i32
    scf.if %12 {
      %c0 = arith.constant 0 : index
      %c0_8 = arith.constant 0 : index
      %16 = vector.load %arg7[%c0, %c0_8] : memref<8x1xf32, #tpu.memory_space<vmem>>, vector<8x1xf32>
      %cst = arith.constant 7.812500e-03 : f32
      %17 = vector.broadcast %cst : f32 to vector<8x1xf32>
      %18 = arith.mulf %16, %17 : vector<8x1xf32>
      %c0_9 = arith.constant 0 : index
      %c0_10 = arith.constant 0 : index
      %19 = vector.load %arg8[%c0_9, %c0_10] : memref<8x1xf32, #tpu.memory_space<vmem>>, vector<8x1xf32>
      %cst_11 = arith.constant 7.812500e-03 : f32
      %20 = vector.broadcast %cst_11 : f32 to vector<8x1xf32>
      %21 = arith.mulf %19, %20 : vector<8x1xf32>
      %22 = arith.mulf %18, %18 : vector<8x1xf32>
      %23 = arith.subf %21, %22 : vector<8x1xf32>
      %cst_12 = arith.constant 9.99999974E-6 : f32
      %24 = vector.broadcast %cst_12 : f32 to vector<8x1xf32>
      %25 = arith.addf %23, %24 : vector<8x1xf32>
      %26 = math.rsqrt %25 : vector<8x1xf32>
      %c0_13 = arith.constant 0 : index
      %c0_14 = arith.constant 0 : index
      %27 = vector.load %arg4[%c0_13, %c0_14] : memref<8x1xf32, #tpu.memory_space<vmem>>, vector<8x1xf32>
      %28 = arith.mulf %27, %26 : vector<8x1xf32>
      %c0_15 = arith.constant 0 : index
      %c0_16 = arith.constant 0 : index
      %29 = vector.load %arg9[%c0_15, %c0_16] : memref<8x1xf32, #tpu.memory_space<vmem>>, vector<8x1xf32>
      tpu.vector_store %arg9[%c0_15, %c0_16], %28 {strides = array<i32>} : memref<8x1xf32, #tpu.memory_space<vmem>>, vector<8x1xf32>,
      %c0_17 = arith.constant 0 : index
      %c0_18 = arith.constant 0 : index
      %30 = vector.load %arg5[%c0_17, %c0_18] : memref<8x1xf32, #tpu.memory_space<vmem>>, vector<8x1xf32>
      %31 = arith.mulf %18, %28 : vector<8x1xf32>
      %32 = arith.subf %30, %31 : vector<8x1xf32>
      %c0_19 = arith.constant 0 : index
      %c0_20 = arith.constant 0 : index
      %33 = vector.load %arg10[%c0_19, %c0_20] : memref<8x1xf32, #tpu.memory_space<vmem>>, vector<8x1xf32>
      tpu.vector_store %arg10[%c0_19, %c0_20], %32 {strides = array<i32>} : memref<8x1xf32, #tpu.memory_space<vmem>>, vector<8x1xf32>,
    } else {
    }
    %c1_i32_6 = arith.constant 1 : i32
    %13 = arith.cmpi eq, %arg1, %c1_i32_6 : i32
    %14 = arith.extui %13 : i1 to i32
    %c0_i32_7 = arith.constant 0 : i32
    %15 = arith.cmpi ne, %14, %c0_i32_7 : i32
    scf.if %15 {
      %c0 = arith.constant 0 : index
      %c0_8 = arith.constant 0 : index
      %c0_9 = arith.constant 0 : index
      %16 = vector.load %arg3[%c0, %c0_8, %c0_9] : memref<2x8x64xf32, #tpu.memory_space<vmem>>, vector<2x8x64xf32>
      %c0_10 = arith.constant 0 : index
      %c0_11 = arith.constant 0 : index
      %17 = vector.load %arg9[%c0_10, %c0_11] : memref<8x1xf32, #tpu.memory_space<vmem>>, vector<8x1xf32>
      %18 = vector.shape_cast %17 : vector<8x1xf32> to vector<1x8x1xf32>
      %19 = vector.broadcast %18 : vector<1x8x1xf32> to vector<2x8x64xf32>
      %20 = arith.mulf %16, %19 : vector<2x8x64xf32>
      %c0_12 = arith.constant 0 : index
      %c0_13 = arith.constant 0 : index
      %21 = vector.load %arg10[%c0_12, %c0_13] : memref<8x1xf32, #tpu.memory_space<vmem>>, vector<8x1xf32>
      %22 = vector.shape_cast %21 : vector<8x1xf32> to vector<1x8x1xf32>
      %23 = vector.broadcast %22 : vector<1x8x1xf32> to vector<2x8x64xf32>
      %24 = arith.addf %20, %23 : vector<2x8x64xf32>
      %c0_14 = arith.constant 0 : index
      %c0_15 = arith.constant 0 : index
      %c0_16 = arith.constant 0 : index
      %25 = vector.load %arg6[%c0_14, %c0_15, %c0_16] : memref<2x8x64xf32, #tpu.memory_space<vmem>>, vector<2x8x64xf32>
      tpu.vector_store %arg6[%c0_14, %c0_15, %c0_16], %24 {strides = array<i32>} : memref<2x8x64xf32, #tpu.memory_space<vmem>>, vector<2x8x64xf32>,
    } else {
    }
    return
  }
  func.func @transform_0(%arg0: i32, %arg1: i32, %arg2: i32) -> (i32, i32, i32) {
    %c0_i32 = arith.constant 0 : i32
    %c0_i32_0 = arith.constant 0 : i32
    return %c0_i32, %arg0, %arg2 : i32, i32, i32
  }
  func.func @transform_1(%arg0: i32, %arg1: i32, %arg2: i32) -> (i32, i32) {
    %c0_i32 = arith.constant 0 : i32
    %c0_i32_0 = arith.constant 0 : i32
    return %arg0, %c0_i32 : i32, i32
  }
  func.func @transform_2(%arg0: i32, %arg1: i32, %arg2: i32) -> (i32, i32) {
    %c0_i32 = arith.constant 0 : i32
    %c0_i32_0 = arith.constant 0 : i32
    return %arg0, %c0_i32 : i32, i32
  }
  func.func @transform_3(%arg0: i32, %arg1: i32, %arg2: i32) -> (i32, i32, i32) {
    %0 = arith.muli %arg2, %arg1 : i32
    %c0_i32 = arith.constant 0 : i32
    %c0_i32_0 = arith.constant 0 : i32
    return %c0_i32, %arg0, %0 : i32, i32, i32
  }
}

</mosaic_0001>

<llo_original>
// kernel: tpu_custom_call.1
$region0: #{tpu_custom_call.1}
  #allocation0 [shape = 'u32[]', space=smem, size = 0x4, offset = 0x4, fixed_abs, tag = 'smem constant byte address 0x4 - core index']
  #allocation1 [shape = 'u32[144,128]{1,0:T(1,128)}', space=vmem, size = 0x12000, scoped, tag = 'internal scratch']
  #allocation2 [shape = 'f32[8,1]{1,0:T(8,128)}', space=vmem, size = 0x1000, scoped, tag = 'scratch operand']
  #allocation3 [shape = 'f32[8,1]{1,0:T(8,128)}', space=vmem, size = 0x1000, scoped, tag = 'scratch operand']
  #allocation4 [shape = 'f32[8,1]{1,0:T(8,128)}', space=vmem, size = 0x1000, scoped, tag = 'scratch operand']
  #allocation5 [shape = 'f32[8,1]{1,0:T(8,128)}', space=vmem, size = 0x1000, scoped, tag = 'scratch operand']
  %s0 = inlined_call_operand.vmem [shape: f32[2,16,64], index: 0, kind: input, shape index: {}]
  %s1 = inlined_call_operand.vmem [shape: f32[16,1], index: 1, kind: input, shape index: {}]
  %s2 = inlined_call_operand.vmem [shape: f32[16,1], index: 2, kind: input, shape index: {}]
  %s3 = inlined_call_operand.hbm [shape: f32[2,16,64], index: 3, kind: output, shape index: {}]
  %s4 = sld [smem:[#allocation0]]
  $region99: #{tpu_custom_call.1} parent=0
    _
  %s6 = ssub.s32 1, %s4
  %s7 = scalar_select 0, %s6, %s4
  $region1: #{tpu_custom_call.1} parent=0
    #allocation6 [shape = 'u8[16384]{0}', space=vmem, size = 0x4000, scoped, tag = 'input window, operand 0']
    #allocation7 [shape = 'u8[16384]{0}', space=vmem, size = 0x4000, scoped, tag = 'output window, operand 0']
    #allocation8 [shape = 's32[2]{0}', space=sflag, size = 0x8, scoped, tag = 'scoped memory for tpu_custom_call.1']
    %8 = vsyncpa [#allocation8], 0
    %s9 = scalar_lea.sflag [#allocation8], 1
    %10 = vsyncpa %s9, 0
    loop: start=0, step=1, limit=6
    $region2: #{tpu_custom_call.1} parent=1 // loop_pre_header
      _
    $region3: #{tpu_custom_call.1} parent=1 // loop_header
      %s12 = sphi 0, %s16
      %p13 = scmp.ge.s32.totalorder %s12, 6
      %s19 = sphi 0, %s38
      %s20 = sphi 0, %s34
      %s21 = sphi 0, %s30
      %s22 = sphi 0, %s19
      %s23 = sphi 0, %s20
      %s24 = sphi 0, %s21
      %s25 = sphi 0, %s22
      %s26 = sphi 0, %s23
      %s27 = sphi 0, %s24
      %s43 = sphi 0, %s45
      %s46 = sphi 0, %s43
      %s47 = sphi 0, %s46
      %s63 = sphi 0, %s47
      %s69 = sphi 0, %s71
      %s72 = sphi 0, %s69
      %s73 = sphi 0, %s72
      %s89 = sphi 0, %s73
      %s95 = sphi 0, %s97
      %s98 = sphi 0, %s95
      %s99 = sphi 0, %s98
      %s115 = sphi 0, %s99
      %s125 = sphi 0, %s127
      %s128 = sphi 0, %s125
      %s129 = sphi 0, %s128
      %s145 = sphi 0, %s129
    $region4: #{tpu_custom_call.1} parent=1 // loop_header_branch
      %15 = sbr.rel (%p13) target = $region8
    $region5: #{tpu_custom_call.1} parent=1 // loop_body
      %s17 = ssub.s32 %s12, 1
      %s18 = ssub.s32 %s12, 2
      %s28 = sadd.s32 1, %s21
      %p29 = scmp.ge.s32.totalorder %s28, 1
      %s30 = scalar_select %p29, 0, %s28
      %s31 = sadd.s32 1, %s20
      %s32 = scalar_select %p29, %s31, %s20
      %p33 = scmp.ge.s32.totalorder %s32, 2
      %s34 = scalar_select %p33, 0, %s32
      %s35 = sadd.s32 1, %s19
      %s36 = scalar_select %p33, %s35, %s19
      %p37 = scmp.ge.s32.totalorder %s36, 2
      %s38 = scalar_select %p37, 0, %s36
      %s39 = ssub.s32 %s19, %s38
      %s40 = ssub.s32 %s21, %s30
      %s41 = sor.u32 %s39, %s40
      %p42 = scmp.eq.s32.totalorder %s41, 0
      %s44 = sadd.s32 %s43, 1
      %s45 = scalar_select %p42, %s43, %s44
      %p48 = pneg %p42
      %p49 = scmp.eq.s32.totalorder %s12, 3
      %p50 = por %p48, %p49
      %p51 = scmp.ne.s32.totalorder %s43, %s46
      %p52 = scmp.eq.s32.totalorder %s12, 0
      %p53 = por %p51, %p52
      %p54 = scmp.ne.s32.totalorder %s43, %s46
      %p55 = scmp.eq.s32.totalorder %s17, 3
      %p56 = por %p54, %p55
      %p57 = scmp.ne.s32.totalorder %s46, %s47
      %p58 = scmp.eq.s32.totalorder %s17, 0
      %p59 = por %p57, %p58
      %p60 = scmp.ne.s32.totalorder %s46, %s47
      %p61 = scmp.eq.s32.totalorder %s18, 3
      %p62 = por %p60, %p61
      %p64 = scmp.ne.s32.totalorder %s47, %s63
      %p65 = scmp.eq.s32.totalorder %s18, 0
      %p66 = por %p64, %p65
      %s67 = ssub.s32 %s19, %s38
      %p68 = scmp.eq.s32.totalorder %s67, 0
      %s70 = sadd.s32 %s69, 1
      %s71 = scalar_select %p68, %s69, %s70
      %p74 = pneg %p68
      %p75 = scmp.eq.s32.totalorder %s12, 3
      %p76 = por %p74, %p75
      %p77 = scmp.ne.s32.totalorder %s69, %s72
      %p78 = scmp.eq.s32.totalorder %s12, 0
      %p79 = por %p77, %p78
      %p80 = scmp.ne.s32.totalorder %s69, %s72
      %p81 = scmp.eq.s32.totalorder %s17, 3
      %p82 = por %p80, %p81
      %p83 = scmp.ne.s32.totalorder %s72, %s73
      %p84 = scmp.eq.s32.totalorder %s17, 0
      %p85 = por %p83, %p84
      %p86 = scmp.ne.s32.totalorder %s72, %s73
      %p87 = scmp.eq.s32.totalorder %s18, 3
      %p88 = por %p86, %p87
      %p90 = scmp.ne.s32.totalorder %s73, %s89
      %p91 = scmp.eq.s32.totalorder %s18, 0
      %p92 = por %p90, %p91
      %s93 = ssub.s32 %s19, %s38
      %p94 = scmp.eq.s32.totalorder %s93, 0
      %s96 = sadd.s32 %s95, 1
      %s97 = scalar_select %p94, %s95, %s96
      %p100 = pneg %p94
      %p101 = scmp.eq.s32.totalorder %s12, 3
      %p102 = por %p100, %p101
      %p103 = scmp.ne.s32.totalorder %s95, %s98
      %p104 = scmp.eq.s32.totalorder %s12, 0
      %p105 = por %p103, %p104
      %p106 = scmp.ne.s32.totalorder %s95, %s98
      %p107 = scmp.eq.s32.totalorder %s17, 3
      %p108 = por %p106, %p107
      %p109 = scmp.ne.s32.totalorder %s98, %s99
      %p110 = scmp.eq.s32.totalorder %s17, 0
      %p111 = por %p109, %p110
      %p112 = scmp.ne.s32.totalorder %s98, %s99
      %p113 = scmp.eq.s32.totalorder %s18, 3
      %p114 = por %p112, %p113
      %p116 = scmp.ne.s32.totalorder %s99, %s115
      %p117 = scmp.eq.s32.totalorder %s18, 0
      %p118 = por %p116, %p117
      %s119 = smul.u32 %s21, %s20
      %s120 = smul.u32 %s30, %s34
      %s121 = ssub.s32 %s19, %s38
      %s122 = ssub.s32 %s119, %s120
      %s123 = sor.u32 %s121, %s122
      %p124 = scmp.eq.s32.totalorder %s123, 0
      %s126 = sadd.s32 %s125, 1
      %s127 = scalar_select %p124, %s125, %s126
      %p130 = pneg %p124
      %p131 = scmp.eq.s32.totalorder %s12, 3
      %p132 = por %p130, %p131
      %p133 = scmp.ne.s32.totalorder %s125, %s128
      %p134 = scmp.eq.s32.totalorder %s12, 0
      %p135 = por %p133, %p134
      %p136 = scmp.ne.s32.totalorder %s125, %s128
      %p137 = scmp.eq.s32.totalorder %s17, 3
      %p138 = por %p136, %p137
      %p139 = scmp.ne.s32.totalorder %s128, %s129
      %p140 = scmp.eq.s32.totalorder %s17, 0
      %p141 = por %p139, %p140
      %p142 = scmp.ne.s32.totalorder %s128, %s129
      %p143 = scmp.eq.s32.totalorder %s18, 3
      %p144 = por %p142, %p143
      %p146 = scmp.ne.s32.totalorder %s129, %s145
      %p147 = scmp.eq.s32.totalorder %s18, 0
      %p148 = por %p146, %p147
      %p149 = scmp.le.s32.totalorder 1, %s12
      %p150 = scmp.lt.s32.totalorder %s12, 5
      %p151 = pnand %p149, %p150
      %p152 = pneg %p151
      // Predicated region
      $region9: #{tpu_custom_call.1} parent=5 // pred_check
        _
      $region10: #{tpu_custom_call.1} parent=5 // pred_check_branch
        %154 = sbr.rel (%p151) target = $region12
      $region11: #{tpu_custom_call.1} parent=5 // pred_region
        %s155 = ssub.s32 %s12, 1
      $region12: #{tpu_custom_call.1} parent=5 // pred_fallthru
        _
      %p156 = scmp.lt.s32.totalorder %s12, 4
      // Predicated region
      $region13: #{tpu_custom_call.1} parent=5 // pred_check
        %p157 = pneg %p156
      $region14: #{tpu_custom_call.1} parent=5 // pred_check_branch
        %159 = sbr.rel (%p157) target = $region16
      $region15: #{tpu_custom_call.1} parent=5 // pred_region
        // Predicated region
        $region17: #{tpu_custom_call.1} parent=15 // pred_check
          %p160 = pneg %p53
        $region18: #{tpu_custom_call.1} parent=15 // pred_check_branch
          %162 = sbr.rel (%p160) target = $region20
        $region19: #{tpu_custom_call.1} parent=15 // pred_region
          %s163 = sand.u32 %s43, 1
          %s164 = sand.u32 %s43, 1
          %s165 = smul.addr %s164, 16
          %s166 = scalar_lea.vmem [#allocation6], %s165
          %s167 = sadd.s32 %s21, %s19
          %s168 = smul.addr %s167, 8
          %s169 = scalar_lea.vmem %s0, %s168
          // Predicated region
          $region21: #{tpu_custom_call.1} parent=19 // pred_check
            _
          $region22: #{tpu_custom_call.1} parent=19 // pred_check_branch
            %171 = sbr.rel (0) target = $region24
          $region23: #{tpu_custom_call.1} parent=19 // pred_region
            // Predicated region
            $region25: #{tpu_custom_call.1} parent=23 // pred_check
              _
            $region26: #{tpu_custom_call.1} parent=23 // pred_check_branch
              %173 = sbr.rel (0) target = $region28
            $region27: #{tpu_custom_call.1} parent=23 // pred_region
              // Predicated region
              $region40: #{tpu_custom_call.1} parent=27 // pred_check
                _
              $region41: #{tpu_custom_call.1} parent=27 // pred_check_branch
                %190 = sbr.rel (0) target = $region43
              $region42: #{tpu_custom_call.1} parent=27 // pred_region
                loop: start=0, step=1, limit=1
                $region44: #{tpu_custom_call.1} parent=42 // loop_pre_header
                  _
                $region45: #{tpu_custom_call.1} parent=42 // loop_header
                  %s192 = sphi 0, %s196
                  %p193 = scmp.ge.s32.totalorder %s192, 1
                  %s197 = sphi %s169, %s169
                  %s198 = sphi %s166, %s166
                $region46: #{tpu_custom_call.1} parent=42 // loop_header_branch
                  %195 = sbr.rel (%p193) target = $region50
                $region47: #{tpu_custom_call.1} parent=42 // loop_body
                  %v199 = vld [vmem:[%s197] sm:$0xff]
                  %200 = vst [vmem:[%s198] sm:$0xff] %v199
                  %v201 = vld [vmem:[%s197 + $0x10] sm:$0xff]
                  %202 = vst [vmem:[%s198 + $0x8] sm:$0xff] %v201
                $region48: #{tpu_custom_call.1} parent=42 // loop_footer
                  %s196 = sadd.s32 1, %s192
                $region49: #{tpu_custom_call.1} parent=42 // loop_footer_branch
                  %191 = sbr.rel target = $region45
                $region50: #{tpu_custom_call.1} parent=42 // loop_exit
                  _
              $region43: #{tpu_custom_call.1} parent=27 // pred_fallthru
                _
              // Predicated region
              $region51: #{tpu_custom_call.1} parent=27 // pred_check
                _
              $region52: #{tpu_custom_call.1} parent=27 // pred_check_branch
                %204 = sbr.rel target = $region54
              $region53: #{tpu_custom_call.1} parent=27 // pred_region
                _
              $region54: #{tpu_custom_call.1} parent=27 // pred_fallthru
                _
            $region28: #{tpu_custom_call.1} parent=23 // pred_fallthru
              _
            // Predicated region
            $region29: #{tpu_custom_call.1} parent=23 // pred_check
              _
            $region30: #{tpu_custom_call.1} parent=23 // pred_check_branch
              %175 = sbr.rel target = $region32
            $region31: #{tpu_custom_call.1} parent=23 // pred_region
              loop: start=0, step=1, limit=1
              $region33: #{tpu_custom_call.1} parent=31 // loop_pre_header
                _
              $region34: #{tpu_custom_call.1} parent=31 // loop_header
                %s178 = sphi 0, %s182
                %p179 = scmp.ge.s32.totalorder %s178, 1
                %s183 = sphi %s169, %s169
                %s184 = sphi %s166, %s166
              $region35: #{tpu_custom_call.1} parent=31 // loop_header_branch
                %181 = sbr.rel (%p179) target = $region39
              $region36: #{tpu_custom_call.1} parent=31 // loop_body
                %v185 = vld [vmem:[%s183] sm:$0xff]
                %186 = vst [vmem:[%s184] sm:$0xff] %v185
                %v187 = vld [vmem:[%s183 + $0x10] sm:$0xff]
                %188 = vst [vmem:[%s184 + $0x8] sm:$0xff] %v187
              $region37: #{tpu_custom_call.1} parent=31 // loop_footer
                %s182 = sadd.s32 1, %s178
              $region38: #{tpu_custom_call.1} parent=31 // loop_footer_branch
                %177 = sbr.rel target = $region34
              $region39: #{tpu_custom_call.1} parent=31 // loop_exit
                _
            $region32: #{tpu_custom_call.1} parent=23 // pred_fallthru
              _
          $region24: #{tpu_custom_call.1} parent=19 // pred_fallthru
            _
          %205 = vnop
        $region20: #{tpu_custom_call.1} parent=15 // pred_fallthru
          _
        // Predicated region
        $region55: #{tpu_custom_call.1} parent=15 // pred_check
          %p206 = pneg %p79
        $region56: #{tpu_custom_call.1} parent=15 // pred_check_branch
          %208 = sbr.rel (%p206) target = $region58
        $region57: #{tpu_custom_call.1} parent=15 // pred_region
          %p209 = scmp.lt.s32.totalorder %s19, 1
          %s210 = scalar_select %p209, %s19, 1
          %s211 = smul.addr %s210, 8
          %s212 = scalar_lea.vmem %s1, %s211
        $region58: #{tpu_custom_call.1} parent=15 // pred_fallthru
          _
        // Predicated region
        $region59: #{tpu_custom_call.1} parent=15 // pred_check
          %p213 = pneg %p105
        $region60: #{tpu_custom_call.1} parent=15 // pred_check_branch
          %215 = sbr.rel (%p213) target = $region62
        $region61: #{tpu_custom_call.1} parent=15 // pred_region
          %p216 = scmp.lt.s32.totalorder %s19, 1
          %s217 = scalar_select %p216, %s19, 1
          %s218 = smul.addr %s217, 8
          %s219 = scalar_lea.vmem %s2, %s218
        $region62: #{tpu_custom_call.1} parent=15 // pred_fallthru
          _
      $region16: #{tpu_custom_call.1} parent=5 // pred_fallthru
        _
      %p220 = scmp.le.s32.totalorder 1, %s12
      %p221 = scmp.lt.s32.totalorder %s12, 5
      %p222 = pnand %p220, %p221
      %p223 = pneg %p222
      // Predicated region
      $region63: #{tpu_custom_call.1} parent=5 // pred_check
        _
      $region64: #{tpu_custom_call.1} parent=5 // pred_check_branch
        %225 = sbr.rel (%p222) target = $region66
      $region65: #{tpu_custom_call.1} parent=5 // pred_region
        %s226 = ssub.s32 %s12, 1
        %s227 = sand.u32 %s46, 1
        %s228 = sand.u32 %s46, 1
        %s229 = smul.addr %s228, 16
        %s230 = scalar_lea.vmem [#allocation6], %s229
        // Predicated region
        $region67: #{tpu_custom_call.1} parent=65 // pred_check
          %p231 = pneg %p59
        $region68: #{tpu_custom_call.1} parent=65 // pred_check_branch
          %233 = sbr.rel (%p231) target = $region70
        $region69: #{tpu_custom_call.1} parent=65 // pred_region
          _
        $region70: #{tpu_custom_call.1} parent=65 // pred_fallthru
          _
        %s234 = sand.u32 %s46, 1
        %s235 = sand.u32 %s46, 1
        %s236 = smul.addr %s235, 16
        %s237 = scalar_lea.vmem [#allocation6], %s236
        %p238 = pneg %p59
        %p239 = pneg %p56
        %p240 = scmp.lt.s32.totalorder %s22, 1
        %s241 = scalar_select %p240, %s22, 1
        %s242 = smul.addr %s241, 8
        %s243 = scalar_lea.vmem %s1, %s242
        %p244 = pneg %p85
        %p245 = pneg %p82
        %p246 = scmp.lt.s32.totalorder %s22, 1
        %s247 = scalar_select %p246, %s22, 1
        %s248 = smul.addr %s247, 8
        %s249 = scalar_lea.vmem %s2, %s248
        %p250 = pneg %p111
        %p251 = pneg %p108
        %p252 = pneg %p141
        %p253 = pneg %p138
        %s254 = sand.u32 %s128, 1
        %s255 = scalar_lea.sflag [#allocation8], %s254
        %s256 = sand.u32 %s128, 1
        %s257 = smul.addr %s256, 16
        %s258 = scalar_lea.vmem [#allocation7], %s257
        %p259 = scmp.lt.s32.totalorder %s22, 1
        %s260 = scalar_select %p259, %s22, 1
        %s261 = smul.addr %s260, 8
        %s262 = scalar_lea.vmem %s1, %s261
        %p263 = scmp.lt.s32.totalorder %s22, 1
        %s264 = scalar_select %p263, %s22, 1
        %s265 = smul.addr %s264, 8
        %s266 = scalar_lea.vmem %s2, %s265
        %s267 = smul.u32 %s24, %s23
        %p268 = scmp.eq.s32.totalorder %s23, 0
        %p269 = scmp.eq.s32.totalorder %s24, 0
        %p270 = pnand %p268, %p269
        %p271 = pneg %p270
        // Predicated region
        $region71: #{tpu_custom_call.1} parent=65 // pred_check
          _
        $region72: #{tpu_custom_call.1} parent=65 // pred_check_branch
          %273 = sbr.rel (%p270) target = $region74
        $region73: #{tpu_custom_call.1} parent=65 // pred_region
          %vm274 = vcmask 7168
          %275 = vst.msk [vmem:[#allocation2] sm:$0xff] %vm274, 0.0
          %276 = vst.msk [vmem:[#allocation3] sm:$0xff] %vm274, 0.0
        $region74: #{tpu_custom_call.1} parent=65 // pred_fallthru
          _
        // Predicated region
        $region75: #{tpu_custom_call.1} parent=65 // pred_check
          %p277 = pneg %p268
        $region76: #{tpu_custom_call.1} parent=65 // pred_check_branch
          %279 = sbr.rel (%p277) target = $region78
        $region77: #{tpu_custom_call.1} parent=65 // pred_region
          %v280 = vld [vmem:[%s230] sm:$0xff]
          %v281 = vld [vmem:[%s230 + $0x8] sm:$0xff]
          %vm282 = vcmask 523264
          %v283 = vsel %vm282, %v280, 0.0
          %v284 = vsel %vm282, %v281, 0.0
          %v285 = vadd.f32 %v283, %v284
          %v286 = vmul.f32 %v280, %v280
          %v287 = vmul.f32 %v281, %v281
          %v288 = vsel %vm282, %v286, 0.0
          %v289 = vsel %vm282, %v287, 0.0
          %v290 = vadd.f32 %v288, %v289
          %v291 = vld [vmem:[#allocation2] sm:$0xff]
          %v292 = vsel %vm282, %v285, 0.0
          %293 = vadd.xlane.f32.xlu0 %v292
          %v294 = vpop.xlane.xlu0 %293
          %v295 = vadd.f32 %v291, %v294
          %vm296 = vcmask 7168
          %297 = vst.msk [vmem:[#allocation2] sm:$0xff] %vm296, %v295
          %v298 = vld [vmem:[#allocation3] sm:$0xff]
          %v299 = vsel %vm282, %v290, 0.0
          %300 = vadd.xlane.f32.xlu0 %v299
          %v301 = vpop.xlane.xlu0 %300
          %v302 = vadd.f32 %v298, %v301
          %303 = vst.msk [vmem:[#allocation3] sm:$0xff] %vm296, %v302
        $region78: #{tpu_custom_call.1} parent=65 // pred_fallthru
          _
        %p304 = scmp.eq.s32.totalorder %s23, 1
        %p305 = pnand %p304, %p269
        %p306 = pneg %p305
        // Predicated region
        $region79: #{tpu_custom_call.1} parent=65 // pred_check
          _
        $region80: #{tpu_custom_call.1} parent=65 // pred_check_branch
          %308 = sbr.rel (%p305) target = $region82
        $region81: #{tpu_custom_call.1} parent=65 // pred_region
          %v309 = vld [vmem:[#allocation2] sm:$0xff]
          %v310 = vmul.f32 %v309, 0.0078125
          %v311 = vld [vmem:[#allocation3] sm:$0xff]
          %v312 = vmul.f32 %v311, 0.0078125
          %v313 = vmul.f32 %v310, %v310
          %v314 = vsub.f32 %v312, %v313
          %v315 = vadd.f32 %v314, 1e-05
          %v316 = vrsqrt.pop %v315
          %v317 = vld [vmem:[%s262] sm:$0xff]
          %v318 = vmul.f32 %v317, %v316
          %vm319 = vcmask 7168
          %320 = vst.msk [vmem:[#allocation4] sm:$0xff] %vm319, %v318
          %v321 = vld [vmem:[%s266] sm:$0xff]
          %v322 = vmul.f32 %v310, %v318
          %v323 = vsub.f32 %v321, %v322
          %324 = vst.msk [vmem:[#allocation5] sm:$0xff] %vm319, %v323
        $region82: #{tpu_custom_call.1} parent=65 // pred_fallthru
          _
        // Predicated region
        $region83: #{tpu_custom_call.1} parent=65 // pred_check
          %p325 = pneg %p304
        $region84: #{tpu_custom_call.1} parent=65 // pred_check_branch
          %327 = sbr.rel (%p325) target = $region86
        $region85: #{tpu_custom_call.1} parent=65 // pred_region
          %v328 = vld [vmem:[%s230] sm:$0xff]
          %v329 = vld [vmem:[%s230 + $0x8] sm:$0xff]
          %v330 = vld [vmem:[#allocation4] sm:$0xff]
          %332 = vset.pattern.permute.xlu0 0
          %333 = vperm.xlu0 %332, %v330
          %v334 = vpop.permute.xlu0 %333
          %v336 = vmul.f32 %v328, %v334
          %v337 = vmul.f32 %v329, %v334
          %v338 = vld [vmem:[#allocation5] sm:$0xff]
          %340 = vset.pattern.permute.xlu0 0
          %341 = vperm.xlu0 %340, %v338
          %v342 = vpop.permute.xlu0 %341
          %v344 = vadd.f32 %v336, %v342
          %v345 = vadd.f32 %v337, %v342
          %vm346 = vcmask 523264
          %347 = vst.msk [vmem:[%s258] sm:$0xff] %vm346, %v344
          %348 = vst.msk [vmem:[%s258 + $0x8] sm:$0xff] %vm346, %v345
        $region86: #{tpu_custom_call.1} parent=65 // pred_fallthru
          _
        %s349 = sand.u32 %s128, 1
        %s350 = scalar_lea.sflag [#allocation8], %s349
        %s351 = sand.u32 %s128, 1
        %s352 = smul.addr %s351, 16
        %s353 = scalar_lea.vmem [#allocation7], %s352
        // Predicated region
        $region87: #{tpu_custom_call.1} parent=65 // pred_check
          %p354 = pneg %p138
        $region88: #{tpu_custom_call.1} parent=65 // pred_check_branch
          %356 = sbr.rel (%p354) target = $region90
        $region89: #{tpu_custom_call.1} parent=65 // pred_region
          %s357 = smul.u32 %s24, %s23
          %s359 = ssub.s32 256, 256
          %360 = vsyncadd %s350, %s359
          %s361 = sadd.s32 %s357, %s22
          %s362 = smul.addr %s361, 128
          %s363 = scalar_lea.hbm %s3, %s362
          %s364 = sshll.u32 %s353, 4
          %s365 = int_to_ptr.vmem [resolvable:$true] %s364
          %370 = dma.vmem_to_hbm [thread:$0]  %s365, 256, %s363, %s350, 128, 256, 8
        $region90: #{tpu_custom_call.1} parent=65 // pred_fallthru
          _
      $region66: #{tpu_custom_call.1} parent=5 // pred_fallthru
        _
      %p371 = scmp.le.s32.totalorder 2, %s12
      // Predicated region
      $region91: #{tpu_custom_call.1} parent=5 // pred_check
        %p372 = pneg %p371
      $region92: #{tpu_custom_call.1} parent=5 // pred_check_branch
        %374 = sbr.rel (%p372) target = $region94
      $region93: #{tpu_custom_call.1} parent=5 // pred_region
        %s375 = ssub.s32 %s12, 2
        // Predicated region
        $region95: #{tpu_custom_call.1} parent=93 // pred_check
          %p376 = pneg %p144
        $region96: #{tpu_custom_call.1} parent=93 // pred_check_branch
          %378 = sbr.rel (%p376) target = $region98
        $region97: #{tpu_custom_call.1} parent=93 // pred_region
          %s379 = sand.u32 %s129, 1
          %s380 = scalar_lea.sflag [#allocation8], %s379
          %s381 = sand.u32 %s129, 1
          %s382 = smul.addr %s381, 16
          %s383 = scalar_lea.vmem [#allocation7], %s382
          %384 = dma.done %s380, 256
        $region98: #{tpu_custom_call.1} parent=93 // pred_fallthru
          _
      $region94: #{tpu_custom_call.1} parent=5 // pred_fallthru
        _
    $region6: #{tpu_custom_call.1} parent=1 // loop_footer
      %s16 = sadd.s32 1, %s12
    $region7: #{tpu_custom_call.1} parent=1 // loop_footer_branch
      %11 = sbr.rel target = $region3
    $region8: #{tpu_custom_call.1} parent=1 // loop_exit
      _
    %385 = vsyncpa [#allocation8], 1
    %s386 = scalar_lea.sflag [#allocation8], 1
    %387 = vsyncpa %s386, 1

</llo_original>
